<compile_context>
chip_gen: v5e
topology: v5e:2x2
jax: 0.10.0
libtpu: 0.0.40
codegen_flags: <defaults>
</compile_context>

<pallas_src>
import functools

import jax
import jax.numpy as jnp
from jax import lax
from jax.experimental import pallas as pl
from jax.experimental.pallas import tpu as pltpu


def _round_up(a, m):
    return (a + m - 1) // m * m


def _layernorm(z, gamma, beta, eps):
    mu = jnp.mean(z, axis=-1, keepdims=True)
    zc = z - mu
    var = jnp.mean(zc * zc, axis=-1, keepdims=True)
    return zc * lax.rsqrt(var + eps) * gamma + beta


def _gelu_tanh(u):
    # TODO(synk): PyTorch nn.GELU() defaults to the exact erf form; the tanh
    # approximation (~1e-3 max abs deviation) is used because it maps onto the TPU EUP.
    c = 0.7978845608028654  # sqrt(2/pi)
    return 0.5 * u * (1.0 + jnp.tanh(c * (u + 0.044715 * u * u * u)))


def _vmem_limit_bytes():
    # ~100 MiB on 128-MiB parts (v5e/v6e), ~51 MiB on 64-MiB parts (v7x).
    try:
        cap = pltpu.get_tpu_info().vmem_capacity_bytes
    except Exception:
        cap = 128 * 1024 * 1024
    return int(min(int(cap * 0.80), 100 * 1024 * 1024))


def _gelu_in_bf16():
    # v6e/v7x VPU + EUP have a bf16 path; v5e and older do not -> keep f32 there.
    try:
        kind = jax.devices()[0].device_kind.lower()
    except Exception:
        return False
    return ("v6" in kind) or ("v7" in kind)


# ---------------------------------------------------------------------------
# Pass 1: LayerNorm_MSA + Q/K/V projections, computed once per sequence tile.
# ---------------------------------------------------------------------------
def _qkv_prepass_kernel(x_ref, g_ref, b_ref, wq_ref, wk_ref, wv_ref,
                        q_ref, k_ref, v_ref, *, eps):
    f32, bf16 = jnp.float32, jnp.bfloat16
    xn = _layernorm(x_ref[0].astype(f32),
                    g_ref[...].astype(f32), b_ref[...].astype(f32), eps).astype(bf16)
    # bf16 operands, f32 MXU accumulation. 1/sqrt(head_dim) already folded into wq.
    q_ref[0] = jnp.dot(xn, wq_ref[...], preferred_element_type=f32).astype(q_ref.dtype)
    k_ref[0] = jnp.dot(xn, wk_ref[...], preferred_element_type=f32).astype(k_ref.dtype)
    v_ref[0] = jnp.dot(xn, wv_ref[...], preferred_element_type=f32).astype(v_ref.dtype)


# ---------------------------------------------------------------------------
# Pass 2: attention over cached K/V + out-proj + residual + LN + MLP + residual.
# ---------------------------------------------------------------------------
def _encoder_kernel(x_ref, q_ref, k_ref, v_ref,
                    wo_ref, bo_ref, ln2_g_ref, ln2_b_ref,
                    w1_ref, b1_ref, w2_ref, b2_ref,
                    o_ref, ctx_scr,
                    *, num_heads, head_dim, eps, valid_n, gelu_bf16):
    f32, bf16 = jnp.float32, jnp.bfloat16
    n_pad = k_ref.shape[1]

    x_res = x_ref[0].astype(f32)          # (tq, D)   residual source
    q = q_ref[0]                          # (tq, D)   bf16, scale folded into W_q
    k = k_ref[0]                          # (N_pad, D) bf16
    v = v_ref[0]                          # (N_pad, D) bf16

    # Additive mask for padded key rows (only materialized when padding exists).
    if n_pad > valid_n:
        key_ids = lax.broadcasted_iota(jnp.int32, (1, n_pad), 1)
        key_bias = jnp.where(key_ids < valid_n, 0.0, -1e30).astype(f32)   # (1, N_pad)
    else:
        key_bias = None

    # Per-head attention on 2-D tiles; normalized context slice-stored into VMEM scratch
    # (no list + concat -> bounded live ranges, no relayout).
    for h in range(num_heads):
        sl = slice(h * head_dim, (h + 1) * head_dim)
        qh, kh, vh = q[:, sl], k[:, sl], v[:, sl]
        # QK^T expressed as a contraction over the shared head axis (no kh.T copy).
        s = lax.dot_general(qh, kh, (((1,), (1,)), ((), ())),
                            preferred_element_type=f32)                   # (tq, N_pad)
        if key_bias is not None:
            s = s + key_bias
        m = jnp.max(s, axis=-1, keepdims=True)
        p = jnp.exp(s - m)                                                # unnormalized
        l = jnp.sum(p, axis=-1, keepdims=True)
        ctx_h = jnp.dot(p.astype(bf16), vh, preferred_element_type=f32)   # (tq, hd)
        ctx_scr[:, sl] = ctx_h * pl.reciprocal(l, approx=True)

    # TODO(synk): attnDrop / MLP dropouts are identity in eval mode; training-mode
    # RNG dropout is not implemented.
    ctx = ctx_scr[...].astype(bf16)                                       # (tq, D)
    attn_out = (jnp.dot(ctx, wo_ref[...], preferred_element_type=f32)
                + bo_ref[...].astype(f32))
    h1 = x_res + attn_out                                                 # residual 1

    h_ln = _layernorm(h1, ln2_g_ref[...].astype(f32), ln2_b_ref[...].astype(f32), eps)
    u = (jnp.dot(h_ln.astype(bf16), w1_ref[...], preferred_element_type=f32)
         + b1_ref[...].astype(f32))
    # TODO(synk): for very large mlp_size on v7x, chunk fc1/GELU/fc2 over the hidden dim.
    if gelu_bf16:
        u = _gelu_tanh(u.astype(bf16))
    else:
        u = _gelu_tanh(u)
    y = (jnp.dot(u.astype(bf16), w2_ref[...], preferred_element_type=f32)
         + b2_ref[...].astype(f32))

    o_ref[0] = (h1 + y).astype(o_ref.dtype)                               # residual 2


def transformer_encoder(x, params, *, num_heads, eps=1e-5, q_tile=128):
    B, N, D = x.shape
    assert D % num_heads == 0
    head_dim = D // num_heads
    bf16, f32 = jnp.bfloat16, jnp.float32
    M = params["w_fc1"].shape[1]

    # Query tile + padded sequence length (ViT's N=197 is neither 8- nor 128-friendly).
    tq = q_tile if N >= q_tile else _round_up(N, 8)
    n_pad = _round_up(N, tq)
    nq = n_pad // tq
    x_pad = x if n_pad == N else jnp.pad(x, ((0, 0), (0, n_pad - N), (0, 0)))

    # bf16 MXU operands; 1/sqrt(head_dim) folded into W_q on the host (scaled in f32).
    scale = head_dim ** (-0.5)
    w_q = (params["w_q"].astype(f32) * scale).astype(bf16)
    w_k = params["w_k"].astype(bf16)
    w_v = params["w_v"].astype(bf16)
    w_o = params["w_proj"].astype(bf16)
    w_1 = params["w_fc1"].astype(bf16)
    w_2 = params["w_fc2"].astype(bf16)

    def const_spec(shape):
        # Constant block (same index every grid step) -> single-buffer it.
        return pl.BlockSpec(shape, lambda b, i: (0, 0), pipeline_mode=pl.Buffered(1))

    cparams = pltpu.CompilerParams(
        dimension_semantics=("parallel", "parallel"),
        vmem_limit_bytes=_vmem_limit_bytes())

    # ---- Pass 1: LN_MSA + Q/K/V projections (once per token) ----------------------
    qkv_shape = jax.ShapeDtypeStruct((B, n_pad, D), bf16)
    q, k, v = pl.pallas_call(
        functools.partial(_qkv_prepass_kernel, eps=eps),
        out_shape=(qkv_shape, qkv_shape, qkv_shape),
        grid_spec=pltpu.PrefetchScalarGridSpec(
            num_scalar_prefetch=0,
            grid=(B, nq),
            in_specs=[
                pl.BlockSpec((1, tq, D), lambda b, i: (b, i, 0)),        # x tile
                const_spec((1, D)), const_spec((1, D)),                  # LN-MSA gamma/beta
                const_spec((D, D)), const_spec((D, D)), const_spec((D, D)),  # Wq, Wk, Wv
            ],
            out_specs=[pl.BlockSpec((1, tq, D), lambda b, i: (b, i, 0))] * 3,
        ),
        compiler_params=cparams,
    )(x_pad, params["ln1_g"], params["ln1_b"], w_q, w_k, w_v)

    # ---- Pass 2: attention + MLP per (batch, query-tile) ---------------------------
    kernel = functools.partial(
        _encoder_kernel, num_heads=num_heads, head_dim=head_dim, eps=eps,
        valid_n=N, gelu_bf16=_gelu_in_bf16())

    out = pl.pallas_call(
        kernel,
        out_shape=jax.ShapeDtypeStruct((B, n_pad, D), x.dtype),
        grid_spec=pltpu.PrefetchScalarGridSpec(
            num_scalar_prefetch=0,
            grid=(B, nq),
            in_specs=[
                pl.BlockSpec((1, tq, D), lambda b, i: (b, i, 0)),        # x (residual rows)
                pl.BlockSpec((1, tq, D), lambda b, i: (b, i, 0)),        # q tile
                pl.BlockSpec((1, n_pad, D), lambda b, i: (b, 0, 0)),     # k (full sequence)
                pl.BlockSpec((1, n_pad, D), lambda b, i: (b, 0, 0)),     # v (full sequence)
                const_spec((D, D)), const_spec((1, D)),                  # w_proj, b_proj
                const_spec((1, D)), const_spec((1, D)),                  # LN-MLP gamma/beta
                const_spec((D, M)), const_spec((1, M)),                  # fc1 weight / bias
                const_spec((M, D)), const_spec((1, D)),                  # fc2 weight / bias
            ],
            out_specs=pl.BlockSpec((1, tq, D), lambda b, i: (b, i, 0)),
            scratch_shapes=[pltpu.VMEM((tq, D), jnp.float32)],           # per-head context
        ),
        compiler_params=cparams,
    )(x_pad, q, k, v,
      w_o, params["b_proj"], params["ln2_g"], params["ln2_b"],
      w_1, params["b_fc1"], w_2, params["b_fc2"])

    return out if n_pad == N else out[:, :N, :]


def reference_transformer_encoder(x, params, *, num_heads, eps=1e-5):
    """Pure-JAX f32 replica of the PyTorch TransformerEncoder forward (eval mode)."""
    B, N, D = x.shape
    hd = D // num_heads
    f32 = jnp.float32

    def ln(z, g, b):
        mu = jnp.mean(z, axis=-1, keepdims=True)
        var = jnp.mean((z - mu) ** 2, axis=-1, keepdims=True)
        return (z - mu) / jnp.sqrt(var + eps) * g + b

    wq = params["w_q"].astype(f32)
    wk = params["w_k"].astype(f32)
    wv = params["w_v"].astype(f32)
    wo = params["w_proj"].astype(f32)
    wf1 = params["w_fc1"].astype(f32)
    wf2 = params["w_fc2"].astype(f32)

    # --- MSA sub-block ---
    xn = ln(x, params["ln1_g"], params["ln1_b"])
    q = (xn @ wq).reshape(B, N, num_heads, hd).transpose(0, 2, 1, 3)
    k = (xn @ wk).reshape(B, N, num_heads, hd).transpose(0, 2, 1, 3)
    v = (xn @ wv).reshape(B, N, num_heads, hd).transpose(0, 2, 1, 3)
    attn = (q @ jnp.swapaxes(k, -2, -1)) * (hd ** -0.5)
    attn = jax.nn.softmax(attn, axis=-1)
    ctx = (attn @ v).transpose(0, 2, 1, 3).reshape(B, N, D)
    h1 = x + ctx @ wo + params["b_proj"]

    # --- MLP sub-block ---
    hn = ln(h1, params["ln2_g"], params["ln2_b"])
    u = _gelu_tanh(hn @ wf1 + params["b_fc1"])
    return h1 + u @ wf2 + params["b_fc2"]


def _make_params(key, D, M):
    ks = jax.random.split(key, 11)

    def linear_w(k, fan_in, shape):
        return (jax.random.normal(k, shape, jnp.float32) * (fan_in ** -0.5)).astype(jnp.bfloat16)

    # nn.Linear(D, 3D, bias=False), weight pre-transposed to (D_in, D_out);
    # columns [0:D]=Q, [D:2D]=K, [2D:3D]=V.
    w_qkv = linear_w(ks[0], D, (D, 3 * D))
    return dict(
        ln1_g=1.0 + 0.1 * jax.random.normal(ks[1], (1, D), jnp.float32),
        ln1_b=0.1 * jax.random.normal(ks[2], (1, D), jnp.float32),
        w_q=w_qkv[:, :D], w_k=w_qkv[:, D:2 * D], w_v=w_qkv[:, 2 * D:],
        w_proj=linear_w(ks[3], D, (D, D)),
        b_proj=0.01 * jax.random.normal(ks[4], (1, D), jnp.float32),
        ln2_g=1.0 + 0.1 * jax.random.normal(ks[5], (1, D), jnp.float32),
        ln2_b=0.1 * jax.random.normal(ks[6], (1, D), jnp.float32),
        w_fc1=linear_w(ks[7], D, (D, M)),
        b_fc1=0.01 * jax.random.normal(ks[8], (1, M), jnp.float32),
        w_fc2=linear_w(ks[9], M, (M, D)),
        b_fc2=0.01 * jax.random.normal(ks[10], (1, D), jnp.float32),
    )


if __name__ == "__main__":
    B, D, H, M = 2, 32, 4, 64
    key = jax.random.PRNGKey(0)
    kp, kx1, kx2 = jax.random.split(key, 3)
    params = _make_params(kp, D, M)

    # Case 1: sequence length already 8-aligned (no padding / masking).
    N1 = 8
    x1 = jax.random.normal(kx1, (B, N1, D), dtype=jnp.float32)
    out1 = jax.block_until_ready(transformer_encoder(x1, params, num_heads=H))
    ref1 = reference_transformer_encoder(x1, params, num_heads=H)
    assert jnp.allclose(out1, ref1, atol=5e-2, rtol=5e-2), (
        f"mismatch (aligned N): max abs diff {jnp.max(jnp.abs(out1 - ref1))}")

    # Case 2: sequence length not 8-aligned (exercises padding + key-mask path, like ViT N=197).
    N2 = 12
    x2 = jax.random.normal(kx2, (B, N2, D), dtype=jnp.float32)
    out2 = jax.block_until_ready(transformer_encoder(x2, params, num_heads=H))
    ref2 = reference_transformer_encoder(x2, params, num_heads=H)
    assert jnp.allclose(out2, ref2, atol=5e-2, rtol=5e-2), (
        f"mismatch (padded N): max abs diff {jnp.max(jnp.abs(out2 - ref2))}")

    print("KERNEL_OK")
</pallas_src>

<mosaic_0001>
module attributes {stable_mosaic.version = 11 : i64} {
  func.func @_qkv_prepass_kernel(%arg0: i32, %arg1: i32, %arg2: memref<1x8x32xf32, #tpu.memory_space<vmem>>, %arg3: memref<1x32xf32, #tpu.memory_space<vmem>>, %arg4: memref<1x32xf32, #tpu.memory_space<vmem>>, %arg5: memref<32x32xbf16, #tpu.memory_space<vmem>>, %arg6: memref<32x32xbf16, #tpu.memory_space<vmem>>, %arg7: memref<32x32xbf16, #tpu.memory_space<vmem>>, %arg8: memref<1x8x32xbf16, #tpu.memory_space<vmem>>, %arg9: memref<1x8x32xbf16, #tpu.memory_space<vmem>>, %arg10: memref<1x8x32xbf16, #tpu.memory_space<vmem>>) attributes {dimension_semantics = [#tpu.dimension_semantics<parallel>, #tpu.dimension_semantics<parallel>], iteration_bounds = array<i64: 2, 1>, scalar_prefetch = 0 : i64, scratch_operands = 0 : i64, tpu.core_type = #tpu.core_type<tc>, window_params = [{transform_indices = @transform_0, window_bounds = array<i64: 1, 8, 32>}, {pipeline_mode = #tpu.pipeline_mode<synchronous>, transform_indices = @transform_1, window_bounds = array<i64: 1, 32>}, {pipeline_mode = #tpu.pipeline_mode<synchronous>, transform_indices = @transform_2, window_bounds = array<i64: 1, 32>}, {pipeline_mode = #tpu.pipeline_mode<synchronous>, transform_indices = @transform_3, window_bounds = array<i64: 32, 32>}, {pipeline_mode = #tpu.pipeline_mode<synchronous>, transform_indices = @transform_4, window_bounds = array<i64: 32, 32>}, {pipeline_mode = #tpu.pipeline_mode<synchronous>, transform_indices = @transform_5, window_bounds = array<i64: 32, 32>}, {transform_indices = @transform_6, window_bounds = array<i64: 1, 8, 32>}, {transform_indices = @transform_7, window_bounds = array<i64: 1, 8, 32>}, {transform_indices = @transform_8, window_bounds = array<i64: 1, 8, 32>}]} {
    %c0 = arith.constant 0 : index
    %c0_0 = arith.constant 0 : index
    %c0_1 = arith.constant 0 : index
    %0 = vector.load %arg2[%c0, %c0_0, %c0_1] : memref<1x8x32xf32, #tpu.memory_space<vmem>>, vector<1x8x32xf32>
    %1 = vector.shape_cast %0 : vector<1x8x32xf32> to vector<8x32xf32>
    %c0_2 = arith.constant 0 : index
    %c0_3 = arith.constant 0 : index
    %2 = vector.load %arg3[%c0_2, %c0_3] : memref<1x32xf32, #tpu.memory_space<vmem>>, vector<1x32xf32>
    %c0_4 = arith.constant 0 : index
    %c0_5 = arith.constant 0 : index
    %3 = vector.load %arg4[%c0_4, %c0_5] : memref<1x32xf32, #tpu.memory_space<vmem>>, vector<1x32xf32>
    %cst = arith.constant dense<0.000000e+00> : vector<8xf32>
    %4 = vector.multi_reduction <add>, %1, %cst [1] : vector<8x32xf32> to vector<8xf32>
    %5 = vector.shape_cast %4 : vector<8xf32> to vector<8x1xf32>
    %cst_6 = arith.constant 3.200000e+01 : f32
    %6 = vector.broadcast %cst_6 : f32 to vector<8x1xf32>
    %7 = arith.divf %5, %6 : vector<8x1xf32>
    %8 = vector.broadcast %7 : vector<8x1xf32> to vector<8x32xf32>
    %9 = arith.subf %1, %8 : vector<8x32xf32>
    %10 = arith.mulf %9, %9 : vector<8x32xf32>
    %cst_7 = arith.constant dense<0.000000e+00> : vector<8xf32>
    %11 = vector.multi_reduction <add>, %10, %cst_7 [1] : vector<8x32xf32> to vector<8xf32>
    %12 = vector.shape_cast %11 : vector<8xf32> to vector<8x1xf32>
    %cst_8 = arith.constant 3.200000e+01 : f32
    %13 = vector.broadcast %cst_8 : f32 to vector<8x1xf32>
    %14 = arith.divf %12, %13 : vector<8x1xf32>
    %cst_9 = arith.constant 9.99999974E-6 : f32
    %15 = vector.broadcast %cst_9 : f32 to vector<8x1xf32>
    %16 = arith.addf %14, %15 : vector<8x1xf32>
    %17 = math.rsqrt %16 : vector<8x1xf32>
    %18 = vector.broadcast %17 : vector<8x1xf32> to vector<8x32xf32>
    %19 = arith.mulf %9, %18 : vector<8x32xf32>
    %20 = vector.broadcast %2 : vector<1x32xf32> to vector<8x32xf32>
    %21 = arith.mulf %19, %20 : vector<8x32xf32>
    %22 = vector.broadcast %3 : vector<1x32xf32> to vector<8x32xf32>
    %23 = arith.addf %21, %22 : vector<8x32xf32>
    %24 = arith.truncf %23 : vector<8x32xf32> to vector<8x32xbf16>
    %c0_10 = arith.constant 0 : index
    %c0_11 = arith.constant 0 : index
    %25 = vector.load %arg5[%c0_10, %c0_11] : memref<32x32xbf16, #tpu.memory_space<vmem>>, vector<32x32xbf16>
    %cst_12 = arith.constant dense<0.000000e+00> : vector<8x32xf32>
    %26 = tpu.matmul %24, %25, %cst_12 {dimension_numbers = #tpu.dot_dimension_numbers<[1], [0], [0], [1], [0, 0, 1, 1], [], []>} : vector<8x32xbf16>, vector<32x32xbf16>, vector<8x32xf32> -> vector<8x32xf32>
    %27 = arith.truncf %26 : vector<8x32xf32> to vector<8x32xbf16>
    %c0_13 = arith.constant 0 : index
    %c0_14 = arith.constant 0 : index
    %c0_15 = arith.constant 0 : index
    %28 = vector.load %arg8[%c0_13, %c0_14, %c0_15] : memref<1x8x32xbf16, #tpu.memory_space<vmem>>, vector<1x8x32xbf16>
    %29 = vector.shape_cast %28 : vector<1x8x32xbf16> to vector<8x32xbf16>
    %30 = vector.shape_cast %27 : vector<8x32xbf16> to vector<1x8x32xbf16>
    tpu.vector_store %arg8[%c0_13, %c0_14, %c0_15], %30 {strides = array<i32>} : memref<1x8x32xbf16, #tpu.memory_space<vmem>>, vector<1x8x32xbf16>,
    %c0_16 = arith.constant 0 : index
    %c0_17 = arith.constant 0 : index
    %31 = vector.load %arg6[%c0_16, %c0_17] : memref<32x32xbf16, #tpu.memory_space<vmem>>, vector<32x32xbf16>
    %cst_18 = arith.constant dense<0.000000e+00> : vector<8x32xf32>
    %32 = tpu.matmul %24, %31, %cst_18 {dimension_numbers = #tpu.dot_dimension_numbers<[1], [0], [0], [1], [0, 0, 1, 1], [], []>} : vector<8x32xbf16>, vector<32x32xbf16>, vector<8x32xf32> -> vector<8x32xf32>
    %33 = arith.truncf %32 : vector<8x32xf32> to vector<8x32xbf16>
    %c0_19 = arith.constant 0 : index
    %c0_20 = arith.constant 0 : index
    %c0_21 = arith.constant 0 : index
    %34 = vector.load %arg9[%c0_19, %c0_20, %c0_21] : memref<1x8x32xbf16, #tpu.memory_space<vmem>>, vector<1x8x32xbf16>
    %35 = vector.shape_cast %34 : vector<1x8x32xbf16> to vector<8x32xbf16>
    %36 = vector.shape_cast %33 : vector<8x32xbf16> to vector<1x8x32xbf16>
    tpu.vector_store %arg9[%c0_19, %c0_20, %c0_21], %36 {strides = array<i32>} : memref<1x8x32xbf16, #tpu.memory_space<vmem>>, vector<1x8x32xbf16>,
    %c0_22 = arith.constant 0 : index
    %c0_23 = arith.constant 0 : index
    %37 = vector.load %arg7[%c0_22, %c0_23] : memref<32x32xbf16, #tpu.memory_space<vmem>>, vector<32x32xbf16>
    %cst_24 = arith.constant dense<0.000000e+00> : vector<8x32xf32>
    %38 = tpu.matmul %24, %37, %cst_24 {dimension_numbers = #tpu.dot_dimension_numbers<[1], [0], [0], [1], [0, 0, 1, 1], [], []>} : vector<8x32xbf16>, vector<32x32xbf16>, vector<8x32xf32> -> vector<8x32xf32>
    %39 = arith.truncf %38 : vector<8x32xf32> to vector<8x32xbf16>
    %c0_25 = arith.constant 0 : index
    %c0_26 = arith.constant 0 : index
    %c0_27 = arith.constant 0 : index
    %40 = vector.load %arg10[%c0_25, %c0_26, %c0_27] : memref<1x8x32xbf16, #tpu.memory_space<vmem>>, vector<1x8x32xbf16>
    %41 = vector.shape_cast %40 : vector<1x8x32xbf16> to vector<8x32xbf16>
    %42 = vector.shape_cast %39 : vector<8x32xbf16> to vector<1x8x32xbf16>
    tpu.vector_store %arg10[%c0_25, %c0_26, %c0_27], %42 {strides = array<i32>} : memref<1x8x32xbf16, #tpu.memory_space<vmem>>, vector<1x8x32xbf16>,
    return
  }
  func.func @transform_0(%arg0: i32, %arg1: i32) -> (i32, i32, i32) {
    %c0_i32 = arith.constant 0 : i32
    %c0_i32_0 = arith.constant 0 : i32
    return %arg0, %arg1, %c0_i32 : i32, i32, i32
  }
  func.func @transform_1(%arg0: i32, %arg1: i32) -> (i32, i32) {
    %c0_i32 = arith.constant 0 : i32
    %c0_i32_0 = arith.constant 0 : i32
    %c0_i32_1 = arith.constant 0 : i32
    return %c0_i32, %c0_i32_0 : i32, i32
  }
  func.func @transform_2(%arg0: i32, %arg1: i32) -> (i32, i32) {
    %c0_i32 = arith.constant 0 : i32
    %c0_i32_0 = arith.constant 0 : i32
    %c0_i32_1 = arith.constant 0 : i32
    return %c0_i32, %c0_i32_0 : i32, i32
  }
  func.func @transform_3(%arg0: i32, %arg1: i32) -> (i32, i32) {
    %c0_i32 = arith.constant 0 : i32
    %c0_i32_0 = arith.constant 0 : i32
    %c0_i32_1 = arith.constant 0 : i32
    return %c0_i32, %c0_i32_0 : i32, i32
  }
  func.func @transform_4(%arg0: i32, %arg1: i32) -> (i32, i32) {
    %c0_i32 = arith.constant 0 : i32
    %c0_i32_0 = arith.constant 0 : i32
    %c0_i32_1 = arith.constant 0 : i32
    return %c0_i32, %c0_i32_0 : i32, i32
  }
  func.func @transform_5(%arg0: i32, %arg1: i32) -> (i32, i32) {
    %c0_i32 = arith.constant 0 : i32
    %c0_i32_0 = arith.constant 0 : i32
    %c0_i32_1 = arith.constant 0 : i32
    return %c0_i32, %c0_i32_0 : i32, i32
  }
  func.func @transform_6(%arg0: i32, %arg1: i32) -> (i32, i32, i32) {
    %c0_i32 = arith.constant 0 : i32
    %c0_i32_0 = arith.constant 0 : i32
    return %arg0, %arg1, %c0_i32 : i32, i32, i32
  }
  func.func @transform_7(%arg0: i32, %arg1: i32) -> (i32, i32, i32) {
    %c0_i32 = arith.constant 0 : i32
    %c0_i32_0 = arith.constant 0 : i32
    return %arg0, %arg1, %c0_i32 : i32, i32, i32
  }
  func.func @transform_8(%arg0: i32, %arg1: i32) -> (i32, i32, i32) {
    %c0_i32 = arith.constant 0 : i32
    %c0_i32_0 = arith.constant 0 : i32
    return %arg0, %arg1, %c0_i32 : i32, i32, i32
  }
}

</mosaic_0001>

<llo_original>
// kernel: tpu_custom_call.1
$region0: #{tpu_custom_call.1}
  #allocation0 [shape = 'u32[]', space=smem, size = 0x4, offset = 0x4, fixed_abs, tag = 'smem constant byte address 0x4 - core index']
  #allocation1 [shape = 'u32[72,128]{1,0:T(1,128)}', space=vmem, size = 0x9000, scoped, tag = 'internal scratch']
  %s0 = inlined_call_operand.hbm [shape: f32[2,8,32], index: 0, kind: input, shape index: {}]
  %s1 = inlined_call_operand.hbm [shape: f32[1,32], index: 1, kind: input, shape index: {}]
  %s2 = inlined_call_operand.vmem [shape: f32[1,32], index: 2, kind: input, shape index: {}]
  %s3 = inlined_call_operand.hbm [shape: bf16[32,32], index: 3, kind: input, shape index: {}]
  %s4 = inlined_call_operand.hbm [shape: bf16[32,32], index: 4, kind: input, shape index: {}]
  %s5 = inlined_call_operand.hbm [shape: bf16[32,32], index: 5, kind: input, shape index: {}]
  %s6 = inlined_call_operand.hbm [shape: bf16[2,8,32], index: 6, kind: output, shape index: {0}]
  %s7 = inlined_call_operand.hbm [shape: bf16[2,8,32], index: 7, kind: output, shape index: {1}]
  %s8 = inlined_call_operand.hbm [shape: bf16[2,8,32], index: 8, kind: output, shape index: {2}]
  %9 = xla_tuple %s6, %s7, %s8
  %s10 = sld [smem:[#allocation0]]
  $region93: #{tpu_custom_call.1} parent=0
    _
  %s12 = ssub.s32 1, %s10
  %s13 = scalar_select 0, %s12, %s10
  $region1: #{tpu_custom_call.1} parent=0
    #allocation2 [shape = 'u8[8192]{0}', space=vmem, size = 0x2000, scoped, tag = 'input window, operand 0']
    #allocation3 [shape = 's32[2]{0}', space=sflag, size = 0x8, scoped, tag = 'scoped memory for tpu_custom_call.1']
    #allocation4 [shape = 's32[2]{0}', space=sflag, size = 0x8, scoped, tag = 'scoped memory for tpu_custom_call.1']
    #allocation5 [shape = 'u8[512]{0}', space=vmem, size = 0x400, scoped, tag = 'input window, operand 1, single buffered']
    #allocation6 [shape = 's32[1]{0}', space=sflag, size = 0x4, scoped, tag = 'scoped memory for tpu_custom_call.1']
    #allocation7 [shape = 'u8[8192]{0}', space=vmem, size = 0x2000, scoped, tag = 'input window, operand 3, single buffered']
    #allocation8 [shape = 'u8[8192]{0}', space=vmem, size = 0x2000, scoped, tag = 'input window, operand 4, single buffered']
    #allocation9 [shape = 's32[1]{0}', space=sflag, size = 0x4, scoped, tag = 'scoped memory for tpu_custom_call.1']
    #allocation10 [shape = 'u8[8192]{0}', space=vmem, size = 0x2000, scoped, tag = 'input window, operand 5, single buffered']
    #allocation11 [shape = 'u8[4096]{0}', space=vmem, size = 0x1000, scoped, tag = 'output window, operand 0']
    #allocation12 [shape = 'u8[4096]{0}', space=vmem, size = 0x1000, scoped, tag = 'output window, operand 1']
    #allocation13 [shape = 's32[2]{0}', space=sflag, size = 0x8, scoped, tag = 'scoped memory for tpu_custom_call.1']
    #allocation14 [shape = 'u8[4096]{0}', space=vmem, size = 0x1000, scoped, tag = 'output window, operand 2']
    %14 = vsyncpa [#allocation3], 0
    %s15 = scalar_lea.sflag [#allocation3], 1
    %16 = vsyncpa %s15, 0
    %17 = vsyncpa [#allocation6], 0
    %18 = vsyncpa [#allocation9], 0
    %19 = vsyncpa [#allocation4], 0
    %s20 = scalar_lea.sflag [#allocation4], 1
    %21 = vsyncpa %s20, 0
    %22 = vsyncpa [#allocation13], 0
    %s23 = scalar_lea.sflag [#allocation13], 1
    %24 = vsyncpa %s23, 0
    loop: start=0, step=1, limit=4
    $region2: #{tpu_custom_call.1} parent=1 // loop_pre_header
      _
    $region3: #{tpu_custom_call.1} parent=1 // loop_header
      %s26 = sphi 0, %s30
      %p27 = scmp.ge.s32.totalorder %s26, 4
      %s33 = sphi 0, %s45
      %s34 = sphi 0, %s41
      %s35 = sphi 0, %s33
      %s36 = sphi 0, %s34
      %s37 = sphi 0, %s35
      %s38 = sphi 0, %s36
      %s50 = sphi 0, %s52
      %s53 = sphi 0, %s50
      %s54 = sphi 0, %s53
      %s70 = sphi 0, %s54
      %s74 = sphi 0, %s74
      %s76 = sphi 0, %s74
      %s77 = sphi 0, %s76
      %s91 = sphi 0, %s77
      %s95 = sphi 0, %s95
      %s97 = sphi 0, %s95
      %s98 = sphi 0, %s97
      %s112 = sphi 0, %s98
      %s116 = sphi 0, %s116
      %s118 = sphi 0, %s116
      %s119 = sphi 0, %s118
      %s133 = sphi 0, %s119
      %s137 = sphi 0, %s137
      %s139 = sphi 0, %s137
      %s140 = sphi 0, %s139
      %s154 = sphi 0, %s140
      %s158 = sphi 0, %s158
      %s160 = sphi 0, %s158
      %s161 = sphi 0, %s160
      %s175 = sphi 0, %s161
      %s183 = sphi 0, %s185
      %s186 = sphi 0, %s183
      %s187 = sphi 0, %s186
      %s203 = sphi 0, %s187
      %s211 = sphi 0, %s213
      %s214 = sphi 0, %s211
      %s215 = sphi 0, %s214
      %s231 = sphi 0, %s215
      %s239 = sphi 0, %s241
      %s242 = sphi 0, %s239
      %s243 = sphi 0, %s242
      %s259 = sphi 0, %s243
    $region4: #{tpu_custom_call.1} parent=1 // loop_header_branch
      %29 = sbr.rel (%p27) target = $region8
    $region5: #{tpu_custom_call.1} parent=1 // loop_body
      %s31 = ssub.s32 %s26, 1
      %s32 = ssub.s32 %s26, 2
      %s39 = sadd.s32 1, %s34
      %p40 = scmp.ge.s32.totalorder %s39, 1
      %s41 = scalar_select %p40, 0, %s39
      %s42 = sadd.s32 1, %s33
      %s43 = scalar_select %p40, %s42, %s33
      %p44 = scmp.ge.s32.totalorder %s43, 2
      %s45 = scalar_select %p44, 0, %s43
      %s46 = ssub.s32 %s33, %s45
      %s47 = ssub.s32 %s34, %s41
      %s48 = sor.u32 %s46, %s47
      %p49 = scmp.eq.s32.totalorder %s48, 0
      %s51 = sadd.s32 %s50, 1
      %s52 = scalar_select %p49, %s50, %s51
      %p55 = pneg %p49
      %p56 = scmp.eq.s32.totalorder %s26, 1
      %p57 = por %p55, %p56
      %p58 = scmp.ne.s32.totalorder %s50, %s53
      %p59 = scmp.eq.s32.totalorder %s26, 0
      %p60 = por %p58, %p59
      %p61 = scmp.ne.s32.totalorder %s50, %s53
      %p62 = scmp.eq.s32.totalorder %s31, 1
      %p63 = por %p61, %p62
      %p64 = scmp.ne.s32.totalorder %s53, %s54
      %p65 = scmp.eq.s32.totalorder %s31, 0
      %p66 = por %p64, %p65
      %p67 = scmp.ne.s32.totalorder %s53, %s54
      %p68 = scmp.eq.s32.totalorder %s32, 1
      %p69 = por %p67, %p68
      %p71 = scmp.ne.s32.totalorder %s54, %s70
      %p72 = scmp.eq.s32.totalorder %s32, 0
      %p73 = por %p71, %p72
      %s75 = sadd.s32 %s74, 1
      %p78 = scmp.eq.s32.totalorder %s26, 1
      %p79 = scmp.ne.s32.totalorder %s74, %s76
      %p80 = scmp.eq.s32.totalorder %s26, 0
      %p81 = por %p79, %p80
      %p82 = scmp.ne.s32.totalorder %s74, %s76
      %p83 = scmp.eq.s32.totalorder %s31, 1
      %p84 = por %p82, %p83
      %p85 = scmp.ne.s32.totalorder %s76, %s77
      %p86 = scmp.eq.s32.totalorder %s31, 0
      %p87 = por %p85, %p86
      %p88 = scmp.ne.s32.totalorder %s76, %s77
      %p89 = scmp.eq.s32.totalorder %s32, 1
      %p90 = por %p88, %p89
      %p92 = scmp.ne.s32.totalorder %s77, %s91
      %p93 = scmp.eq.s32.totalorder %s32, 0
      %p94 = por %p92, %p93
      %s96 = sadd.s32 %s95, 1
      %p99 = scmp.eq.s32.totalorder %s26, 1
      %p100 = scmp.ne.s32.totalorder %s95, %s97
      %p101 = scmp.eq.s32.totalorder %s26, 0
      %p102 = por %p100, %p101
      %p103 = scmp.ne.s32.totalorder %s95, %s97
      %p104 = scmp.eq.s32.totalorder %s31, 1
      %p105 = por %p103, %p104
      %p106 = scmp.ne.s32.totalorder %s97, %s98
      %p107 = scmp.eq.s32.totalorder %s31, 0
      %p108 = por %p106, %p107
      %p109 = scmp.ne.s32.totalorder %s97, %s98
      %p110 = scmp.eq.s32.totalorder %s32, 1
      %p111 = por %p109, %p110
      %p113 = scmp.ne.s32.totalorder %s98, %s112
      %p114 = scmp.eq.s32.totalorder %s32, 0
      %p115 = por %p113, %p114
      %s117 = sadd.s32 %s116, 1
      %p120 = scmp.eq.s32.totalorder %s26, 1
      %p121 = scmp.ne.s32.totalorder %s116, %s118
      %p122 = scmp.eq.s32.totalorder %s26, 0
      %p123 = por %p121, %p122
      %p124 = scmp.ne.s32.totalorder %s116, %s118
      %p125 = scmp.eq.s32.totalorder %s31, 1
      %p126 = por %p124, %p125
      %p127 = scmp.ne.s32.totalorder %s118, %s119
      %p128 = scmp.eq.s32.totalorder %s31, 0
      %p129 = por %p127, %p128
      %p130 = scmp.ne.s32.totalorder %s118, %s119
      %p131 = scmp.eq.s32.totalorder %s32, 1
      %p132 = por %p130, %p131
      %p134 = scmp.ne.s32.totalorder %s119, %s133
      %p135 = scmp.eq.s32.totalorder %s32, 0
      %p136 = por %p134, %p135
      %s138 = sadd.s32 %s137, 1
      %p141 = scmp.eq.s32.totalorder %s26, 1
      %p142 = scmp.ne.s32.totalorder %s137, %s139
      %p143 = scmp.eq.s32.totalorder %s26, 0
      %p144 = por %p142, %p143
      %p145 = scmp.ne.s32.totalorder %s137, %s139
      %p146 = scmp.eq.s32.totalorder %s31, 1
      %p147 = por %p145, %p146
      %p148 = scmp.ne.s32.totalorder %s139, %s140
      %p149 = scmp.eq.s32.totalorder %s31, 0
      %p150 = por %p148, %p149
      %p151 = scmp.ne.s32.totalorder %s139, %s140
      %p152 = scmp.eq.s32.totalorder %s32, 1
      %p153 = por %p151, %p152
      %p155 = scmp.ne.s32.totalorder %s140, %s154
      %p156 = scmp.eq.s32.totalorder %s32, 0
      %p157 = por %p155, %p156
      %s159 = sadd.s32 %s158, 1
      %p162 = scmp.eq.s32.totalorder %s26, 1
      %p163 = scmp.ne.s32.totalorder %s158, %s160
      %p164 = scmp.eq.s32.totalorder %s26, 0
      %p165 = por %p163, %p164
      %p166 = scmp.ne.s32.totalorder %s158, %s160
      %p167 = scmp.eq.s32.totalorder %s31, 1
      %p168 = por %p166, %p167
      %p169 = scmp.ne.s32.totalorder %s160, %s161
      %p170 = scmp.eq.s32.totalorder %s31, 0
      %p171 = por %p169, %p170
      %p172 = scmp.ne.s32.totalorder %s160, %s161
      %p173 = scmp.eq.s32.totalorder %s32, 1
      %p174 = por %p172, %p173
      %p176 = scmp.ne.s32.totalorder %s161, %s175
      %p177 = scmp.eq.s32.totalorder %s32, 0
      %p178 = por %p176, %p177
      %s179 = ssub.s32 %s33, %s45
      %s180 = ssub.s32 %s34, %s41
      %s181 = sor.u32 %s179, %s180
      %p182 = scmp.eq.s32.totalorder %s181, 0
      %s184 = sadd.s32 %s183, 1
      %s185 = scalar_select %p182, %s183, %s184
      %p188 = pneg %p182
      %p189 = scmp.eq.s32.totalorder %s26, 1
      %p190 = por %p188, %p189
      %p191 = scmp.ne.s32.totalorder %s183, %s186
      %p192 = scmp.eq.s32.totalorder %s26, 0
      %p193 = por %p191, %p192
      %p194 = scmp.ne.s32.totalorder %s183, %s186
      %p195 = scmp.eq.s32.totalorder %s31, 1
      %p196 = por %p194, %p195
      %p197 = scmp.ne.s32.totalorder %s186, %s187
      %p198 = scmp.eq.s32.totalorder %s31, 0
      %p199 = por %p197, %p198
      %p200 = scmp.ne.s32.totalorder %s186, %s187
      %p201 = scmp.eq.s32.totalorder %s32, 1
      %p202 = por %p200, %p201
      %p204 = scmp.ne.s32.totalorder %s187, %s203
      %p205 = scmp.eq.s32.totalorder %s32, 0
      %p206 = por %p204, %p205
      %s207 = ssub.s32 %s33, %s45
      %s208 = ssub.s32 %s34, %s41
      %s209 = sor.u32 %s207, %s208
      %p210 = scmp.eq.s32.totalorder %s209, 0
      %s212 = sadd.s32 %s211, 1
      %s213 = scalar_select %p210, %s211, %s212
      %p216 = pneg %p210
      %p217 = scmp.eq.s32.totalorder %s26, 1
      %p218 = por %p216, %p217
      %p219 = scmp.ne.s32.totalorder %s211, %s214
      %p220 = scmp.eq.s32.totalorder %s26, 0
      %p221 = por %p219, %p220
      %p222 = scmp.ne.s32.totalorder %s211, %s214
      %p223 = scmp.eq.s32.totalorder %s31, 1
      %p224 = por %p222, %p223
      %p225 = scmp.ne.s32.totalorder %s214, %s215
      %p226 = scmp.eq.s32.totalorder %s31, 0
      %p227 = por %p225, %p226
      %p228 = scmp.ne.s32.totalorder %s214, %s215
      %p229 = scmp.eq.s32.totalorder %s32, 1
      %p230 = por %p228, %p229
      %p232 = scmp.ne.s32.totalorder %s215, %s231
      %p233 = scmp.eq.s32.totalorder %s32, 0
      %p234 = por %p232, %p233
      %s235 = ssub.s32 %s33, %s45
      %s236 = ssub.s32 %s34, %s41
      %s237 = sor.u32 %s235, %s236
      %p238 = scmp.eq.s32.totalorder %s237, 0
      %s240 = sadd.s32 %s239, 1
      %s241 = scalar_select %p238, %s239, %s240
      %p244 = pneg %p238
      %p245 = scmp.eq.s32.totalorder %s26, 1
      %p246 = por %p244, %p245
      %p247 = scmp.ne.s32.totalorder %s239, %s242
      %p248 = scmp.eq.s32.totalorder %s26, 0
      %p249 = por %p247, %p248
      %p250 = scmp.ne.s32.totalorder %s239, %s242
      %p251 = scmp.eq.s32.totalorder %s31, 1
      %p252 = por %p250, %p251
      %p253 = scmp.ne.s32.totalorder %s242, %s243
      %p254 = scmp.eq.s32.totalorder %s31, 0
      %p255 = por %p253, %p254
      %p256 = scmp.ne.s32.totalorder %s242, %s243
      %p257 = scmp.eq.s32.totalorder %s32, 1
      %p258 = por %p256, %p257
      %p260 = scmp.ne.s32.totalorder %s243, %s259
      %p261 = scmp.eq.s32.totalorder %s32, 0
      %p262 = por %p260, %p261
      %p263 = scmp.le.s32.totalorder 1, %s26
      %p264 = scmp.lt.s32.totalorder %s26, 3
      %p265 = pnand %p263, %p264
      %p266 = pneg %p265
      // Predicated region
      $region9: #{tpu_custom_call.1} parent=5 // pred_check
        _
      $region10: #{tpu_custom_call.1} parent=5 // pred_check_branch
        %268 = sbr.rel (%p265) target = $region12
      $region11: #{tpu_custom_call.1} parent=5 // pred_region
        %s269 = ssub.s32 %s26, 1
        // Predicated region
        $region13: #{tpu_custom_call.1} parent=11 // pred_check
          %p270 = pneg %p87
        $region14: #{tpu_custom_call.1} parent=11 // pred_check_branch
          %272 = sbr.rel (%p270) target = $region16
        $region15: #{tpu_custom_call.1} parent=11 // pred_region
          %274 = vsyncadd [#allocation6], 0
          %s276 = sshll.u32 %s1, 4
          %s277 = int_to_ptr.hbm [resolvable:$true] %s276
          %s278 = sshll.u32 [#allocation5], 4
          %s279 = int_to_ptr.vmem [resolvable:$true] %s278
          %281 = dma.hbm_to_vmem [thread:$0]  %s277, 16, %s279, [#allocation6]
        $region16: #{tpu_custom_call.1} parent=11 // pred_fallthru
          _
        // Predicated region
        $region17: #{tpu_custom_call.1} parent=11 // pred_check
          %p282 = pneg %p108
        $region18: #{tpu_custom_call.1} parent=11 // pred_check_branch
          %284 = sbr.rel (%p282) target = $region20
        $region19: #{tpu_custom_call.1} parent=11 // pred_region
          _
        $region20: #{tpu_custom_call.1} parent=11 // pred_fallthru
          _
        // Predicated region
        $region21: #{tpu_custom_call.1} parent=11 // pred_check
          %p285 = pneg %p129
        $region22: #{tpu_custom_call.1} parent=11 // pred_check_branch
          %287 = sbr.rel (%p285) target = $region24
        $region23: #{tpu_custom_call.1} parent=11 // pred_region
          %289 = vsyncadd [#allocation6], 0
          %s290 = sshll.u32 %s3, 4
          %s291 = int_to_ptr.hbm [resolvable:$true] %s290
          %s292 = sshll.u32 [#allocation7], 4
          %s293 = int_to_ptr.vmem [resolvable:$true] %s292
          %298 = dma.hbm_to_vmem [thread:$0]  %s291, 256, %s293, [#allocation6], 64, 64, 4
        $region24: #{tpu_custom_call.1} parent=11 // pred_fallthru
          _
        // Predicated region
        $region25: #{tpu_custom_call.1} parent=11 // pred_check
          %p299 = pneg %p150
        $region26: #{tpu_custom_call.1} parent=11 // pred_check_branch
          %301 = sbr.rel (%p299) target = $region28
        $region27: #{tpu_custom_call.1} parent=11 // pred_region
          %303 = vsyncadd [#allocation9], 0
          %s304 = sshll.u32 %s4, 4
          %s305 = int_to_ptr.hbm [resolvable:$true] %s304
          %s306 = sshll.u32 [#allocation8], 4
          %s307 = int_to_ptr.vmem [resolvable:$true] %s306
          %312 = dma.hbm_to_vmem [thread:$0]  %s305, 256, %s307, [#allocation9], 64, 64, 4
        $region28: #{tpu_custom_call.1} parent=11 // pred_fallthru
          _
        // Predicated region
        $region29: #{tpu_custom_call.1} parent=11 // pred_check
          %p313 = pneg %p171
        $region30: #{tpu_custom_call.1} parent=11 // pred_check_branch
          %315 = sbr.rel (%p313) target = $region32
        $region31: #{tpu_custom_call.1} parent=11 // pred_region
          %317 = vsyncadd [#allocation9], 0
          %s318 = sshll.u32 %s5, 4
          %s319 = int_to_ptr.hbm [resolvable:$true] %s318
          %s320 = sshll.u32 [#allocation10], 4
          %s321 = int_to_ptr.vmem [resolvable:$true] %s320
          %326 = dma.hbm_to_vmem [thread:$0]  %s319, 256, %s321, [#allocation9], 64, 64, 4
        $region32: #{tpu_custom_call.1} parent=11 // pred_fallthru
          _
      $region12: #{tpu_custom_call.1} parent=5 // pred_fallthru
        _
      %p327 = scmp.lt.s32.totalorder %s26, 2
      // Predicated region
      $region33: #{tpu_custom_call.1} parent=5 // pred_check
        %p328 = pneg %p327
      $region34: #{tpu_custom_call.1} parent=5 // pred_check_branch
        %330 = sbr.rel (%p328) target = $region36
      $region35: #{tpu_custom_call.1} parent=5 // pred_region
        // Predicated region
        $region37: #{tpu_custom_call.1} parent=35 // pred_check
          %p331 = pneg %p60
        $region38: #{tpu_custom_call.1} parent=35 // pred_check_branch
          %333 = sbr.rel (%p331) target = $region40
        $region39: #{tpu_custom_call.1} parent=35 // pred_region
          %s334 = sand.u32 %s50, 1
          %s335 = scalar_lea.sflag [#allocation3], %s334
          %s336 = sand.u32 %s50, 1
          %s337 = smul.addr %s336, 8
          %s338 = scalar_lea.vmem [#allocation2], %s337
          %340 = vsyncadd %s335, 0
          %s341 = sadd.s32 %s34, %s33
          %s342 = smul.addr %s341, 8
          %s343 = scalar_lea.hbm %s0, %s342
          %s345 = sshll.u32 %s343, 4
          %s346 = int_to_ptr.hbm [resolvable:$true] %s345
          %s347 = sshll.u32 %s338, 4
          %s348 = int_to_ptr.vmem [resolvable:$true] %s347
          %350 = dma.hbm_to_vmem [thread:$0]  %s346, 128, %s348, %s335
        $region40: #{tpu_custom_call.1} parent=35 // pred_fallthru
          _
      $region36: #{tpu_custom_call.1} parent=5 // pred_fallthru
        _
      %p351 = scmp.le.s32.totalorder 1, %s26
      %p352 = scmp.lt.s32.totalorder %s26, 3
      %p353 = pnand %p351, %p352
      %p354 = pneg %p353
      // Predicated region
      $region41: #{tpu_custom_call.1} parent=5 // pred_check
        _
      $region42: #{tpu_custom_call.1} parent=5 // pred_check_branch
        %356 = sbr.rel (%p353) target = $region44
      $region43: #{tpu_custom_call.1} parent=5 // pred_region
        %s357 = ssub.s32 %s26, 1
        %s358 = sand.u32 %s53, 1
        %s359 = scalar_lea.sflag [#allocation3], %s358
        %s360 = sand.u32 %s53, 1
        %s361 = smul.addr %s360, 8
        %s362 = scalar_lea.vmem [#allocation2], %s361
        // Predicated region
        $region45: #{tpu_custom_call.1} parent=43 // pred_check
          %p363 = pneg %p66
        $region46: #{tpu_custom_call.1} parent=43 // pred_check_branch
          %365 = sbr.rel (%p363) target = $region48
        $region47: #{tpu_custom_call.1} parent=43 // pred_region
          %367 = dma.done %s359, 128
        $region48: #{tpu_custom_call.1} parent=43 // pred_fallthru
          _
        // Predicated region
        $region49: #{tpu_custom_call.1} parent=43 // pred_check
          %p368 = pneg %p87
        $region50: #{tpu_custom_call.1} parent=43 // pred_check_branch
          %370 = sbr.rel (%p368) target = $region52
        $region51: #{tpu_custom_call.1} parent=43 // pred_region
          %372 = dma.done [#allocation6], 16
        $region52: #{tpu_custom_call.1} parent=43 // pred_fallthru
          _
        // Predicated region
        $region53: #{tpu_custom_call.1} parent=43 // pred_check
          %p373 = pneg %p129
        $region54: #{tpu_custom_call.1} parent=43 // pred_check_branch
          %375 = sbr.rel (%p373) target = $region56
        $region55: #{tpu_custom_call.1} parent=43 // pred_region
          %377 = dma.done [#allocation6], 256
        $region56: #{tpu_custom_call.1} parent=43 // pred_fallthru
          _
        // Predicated region
        $region57: #{tpu_custom_call.1} parent=43 // pred_check
          %p378 = pneg %p150
        $region58: #{tpu_custom_call.1} parent=43 // pred_check_branch
          %380 = sbr.rel (%p378) target = $region60
        $region59: #{tpu_custom_call.1} parent=43 // pred_region
          %382 = dma.done [#allocation9], 256
        $region60: #{tpu_custom_call.1} parent=43 // pred_fallthru
          _
        // Predicated region
        $region61: #{tpu_custom_call.1} parent=43 // pred_check
          %p383 = pneg %p171
        $region62: #{tpu_custom_call.1} parent=43 // pred_check_branch
          %385 = sbr.rel (%p383) target = $region64
        $region63: #{tpu_custom_call.1} parent=43 // pred_region
          %387 = dma.done [#allocation9], 256
        $region64: #{tpu_custom_call.1} parent=43 // pred_fallthru
          _
        %s388 = sand.u32 %s53, 1
        %s389 = scalar_lea.sflag [#allocation3], %s388
        %s390 = sand.u32 %s53, 1
        %s391 = smul.addr %s390, 8
        %s392 = scalar_lea.vmem [#allocation2], %s391
        %p393 = pneg %p66
        %p394 = pneg %p63
        %p395 = pneg %p87
        %p396 = pneg %p84
        %p397 = pneg %p108
        %p398 = pneg %p105
        %p399 = pneg %p129
        %p400 = pneg %p126
        %p401 = pneg %p150
        %p402 = pneg %p147
        %p403 = pneg %p171
        %p404 = pneg %p168
        %p405 = pneg %p199
        %p406 = pneg %p196
        %s407 = sand.u32 %s186, 1
        %s408 = scalar_lea.sflag [#allocation4], %s407
        %s409 = sand.u32 %s186, 1
        %s410 = smul.addr %s409, 4
        %s411 = scalar_lea.vmem [#allocation11], %s410
        %p412 = pneg %p227
        %p413 = pneg %p224
        %s414 = sand.u32 %s31, 1
        %s415 = scalar_lea.sflag [#allocation13], %s414
        %s416 = sand.u32 %s214, 1
        %s417 = smul.addr %s416, 4
        %s418 = scalar_lea.vmem [#allocation12], %s417
        %p419 = pneg %p255
        %p420 = pneg %p252
        %s421 = sand.u32 %s31, 1
        %s422 = scalar_lea.sflag [#allocation13], %s421
        %s423 = sand.u32 %s242, 1
        %s424 = smul.addr %s423, 4
        %s425 = scalar_lea.vmem [#allocation14], %s424
        %v427 = vld [vmem:[%s362] sm:$0xff]
        %v428 = vld [vmem:[#allocation5] sm:$0x1]
        %v429 = vld [vmem:[%s2] sm:$0x1]
        %vm430 = vcmask 261120
        %v431 = vsel %vm430, %v427, 0.0
        %432 = vadd.xlane.f32.xlu0 %v431
        %v433 = vpop.xlane.xlu0 %432
        %v434 = vrcp.pop 32.0
        %v435 = vmul.f32 32.0, %v434
        %v436 = vsub.f32 1.0, %v435
        %v437 = vmul.f32 %v434, %v436
        %v438 = vadd.f32 %v434, %v437
        %vm439 = vweird.f32 %v434
        %v440 = vsel %vm439, %v434, %v438
        %v441 = vmul.f32 %v433, %v440
        %v442 = vsub.f32 %v427, %v441
        %v443 = vmul.f32 %v442, %v442
        %v444 = vsel %vm430, %v443, 0.0
        %445 = vadd.xlane.f32.xlu0 %v444
        %v446 = vpop.xlane.xlu0 %445
        %v447 = vmul.f32 %v446, %v440
        %v448 = vadd.f32 %v447, 1e-05
        %v449 = vrsqrt.pop %v448
        %v450 = vmul.f32 %v449, %v448
        %v451 = vmul.f32 %v450, %v449
        %v452 = vmul.f32 0.5, %v451
        %v453 = vsub.f32 1.5, %v452
        %v454 = vmul.f32 %v449, %v453
        %vm455 = vweird.f32 %v448
        %vm456 = vweird.f32 %v449
        %vm457 = vmor %vm455, %vm456
        %v458 = vsel %vm457, %v449, %v454
        %v459 = vmul.f32 %v442, %v458
        %v461 = vperm.slane %v428, 0
        %v463 = vmul.f32 %v459, %v461
        %v465 = vperm.slane %v429, 0
        %v467 = vadd.f32 %v463, %v465
        %v468 = vpack.c.bf16 %v467, %v467
        %v469 = vld [vmem:[#allocation7] sm:$0xf]
        %v470 = vld [vmem:[#allocation7 + $0x4] sm:$0xf]
        %v471 = vld [vmem:[#allocation7 + $0x8] sm:$0xf]
        %v472 = vld [vmem:[#allocation7 + $0xc] sm:$0xf]
        %v477 = vunpack.c.l.b16 %v469
        %v478 = vunpack.c.l.b16 %v470
        %v479 = vunpack.c.l.b16 %v471
        %v480 = vunpack.c.l.b16 %v472
        %v481 = vpack.c.b16 %v478, %v477
        %v482 = vpack.c.b16 %v480, %v479
        %v486 = vsel %vm430, %v468, 0
        %488 = vmatpush.bf16.msra.mxu0 0
        %489 = vmatpush.bf16.msra.mxu0 0
        %490 = vmatpush.bf16.msra.mxu0 0
        %491 = vmatpush.bf16.msra.mxu0 0
        %492 = vmatpush.bf16.msra.mxu0 0
        %493 = vmatpush.bf16.msra.mxu0 0
        %494 = vmatpush.bf16.msra.mxu0 %v482
        %495 = vmatpush.bf16.msra.mxu0 %v481
        %496 = vmatmul.bf16.gmra.mxu0 %v486
        %v497 = vpop.f32.mrf.mxu0
        %v498 = vadd.f32 0.0, %v497
        %v499 = vpop.f32.mrf.mxu0
        %500 = vdwg.mxu0
        %v501 = vpack.c.bf16 %v498, %v498
        %vm502 = vcmask 257024
        %503 = vst.msk [vmem:[%s411] sm:$0xf] %vm502, %v501
        %v504 = vld [vmem:[#allocation8] sm:$0xf]
        %v505 = vld [vmem:[#allocation8 + $0x4] sm:$0xf]
        %v506 = vld [vmem:[#allocation8 + $0x8] sm:$0xf]
        %v507 = vld [vmem:[#allocation8 + $0xc] sm:$0xf]
        %v512 = vunpack.c.l.b16 %v504
        %v513 = vunpack.c.l.b16 %v505
        %v514 = vunpack.c.l.b16 %v506
        %v515 = vunpack.c.l.b16 %v507
        %v516 = vpack.c.b16 %v513, %v512
        %v517 = vpack.c.b16 %v515, %v514
        %520 = vmatpush.bf16.msra.mxu0 0
        %521 = vmatpush.bf16.msra.mxu0 0
        %522 = vmatpush.bf16.msra.mxu0 0
        %523 = vmatpush.bf16.msra.mxu0 0
        %524 = vmatpush.bf16.msra.mxu0 0
        %525 = vmatpush.bf16.msra.mxu0 0
        %526 = vmatpush.bf16.msra.mxu0 %v517
        %527 = vmatpush.bf16.msra.mxu0 %v516
        %528 = vmatmul.bf16.gmra.mxu0 %v486
        %v529 = vpop.f32.mrf.mxu0
        %v530 = vadd.f32 0.0, %v529
        %v531 = vpop.f32.mrf.mxu0
        %532 = vdwg.mxu0
        %v533 = vpack.c.bf16 %v530, %v530
        %534 = vst.msk [vmem:[%s418] sm:$0xf] %vm502, %v533
        %v535 = vld [vmem:[#allocation10] sm:$0xf]
        %v536 = vld [vmem:[#allocation10 + $0x4] sm:$0xf]
        %v537 = vld [vmem:[#allocation10 + $0x8] sm:$0xf]
        %v538 = vld [vmem:[#allocation10 + $0xc] sm:$0xf]
        %v543 = vunpack.c.l.b16 %v535
        %v544 = vunpack.c.l.b16 %v536
        %v545 = vunpack.c.l.b16 %v537
        %v546 = vunpack.c.l.b16 %v538
        %v547 = vpack.c.b16 %v544, %v543
        %v548 = vpack.c.b16 %v546, %v545
        %551 = vmatpush.bf16.msra.mxu0 0
        %552 = vmatpush.bf16.msra.mxu0 0
        %553 = vmatpush.bf16.msra.mxu0 0
        %554 = vmatpush.bf16.msra.mxu0 0
        %555 = vmatpush.bf16.msra.mxu0 0
        %556 = vmatpush.bf16.msra.mxu0 0
        %557 = vmatpush.bf16.msra.mxu0 %v548
        %558 = vmatpush.bf16.msra.mxu0 %v547
        %559 = vmatmul.bf16.gmra.mxu0 %v486
        %v560 = vpop.f32.mrf.mxu0
        %v561 = vadd.f32 0.0, %v560
        %v562 = vpop.f32.mrf.mxu0
        %563 = vdwg.mxu0
        %v564 = vpack.c.bf16 %v561, %v561
        %565 = vst.msk [vmem:[%s425] sm:$0xf] %vm502, %v564
        %s566 = sand.u32 %s186, 1
        %s567 = scalar_lea.sflag [#allocation4], %s566
        %s568 = sand.u32 %s186, 1
        %s569 = smul.addr %s568, 4
        %s570 = scalar_lea.vmem [#allocation11], %s569
        %s571 = sand.u32 %s31, 1
        %s572 = scalar_lea.sflag [#allocation13], %s571
        %s573 = sand.u32 %s214, 1
        %s574 = smul.addr %s573, 4
        %s575 = scalar_lea.vmem [#allocation12], %s574
        %s576 = sand.u32 %s31, 1
        %s577 = scalar_lea.sflag [#allocation13], %s576
        %s578 = sand.u32 %s242, 1
        %s579 = smul.addr %s578, 4
        %s580 = scalar_lea.vmem [#allocation14], %s579
        // Predicated region
        $region65: #{tpu_custom_call.1} parent=43 // pred_check
          %p581 = pneg %p196
        $region66: #{tpu_custom_call.1} parent=43 // pred_check_branch
          %583 = sbr.rel (%p581) target = $region68
        $region67: #{tpu_custom_call.1} parent=43 // pred_region
          %585 = vsyncadd %s567, 0
          %s586 = sadd.s32 %s36, %s35
          %s587 = smul.addr %s586, 4
          %s588 = scalar_lea.hbm %s6, %s587
          %s590 = sshll.u32 %s570, 4
          %s591 = int_to_ptr.vmem [resolvable:$true] %s590
          %s592 = sshll.u32 %s588, 4
          %s593 = int_to_ptr.hbm [resolvable:$true] %s592
          %595 = dma.vmem_to_hbm [thread:$0]  %s591, 64, %s593, %s567
        $region68: #{tpu_custom_call.1} parent=43 // pred_fallthru
          _
        // Predicated region
        $region69: #{tpu_custom_call.1} parent=43 // pred_check
          %p596 = pneg %p224
        $region70: #{tpu_custom_call.1} parent=43 // pred_check_branch
          %598 = sbr.rel (%p596) target = $region72
        $region71: #{tpu_custom_call.1} parent=43 // pred_region
          %600 = vsyncadd %s572, 0
          %s601 = sadd.s32 %s36, %s35
          %s602 = smul.addr %s601, 4
          %s603 = scalar_lea.hbm %s7, %s602
          %s605 = sshll.u32 %s575, 4
          %s606 = int_to_ptr.vmem [resolvable:$true] %s605
          %s607 = sshll.u32 %s603, 4
          %s608 = int_to_ptr.hbm [resolvable:$true] %s607
          %610 = dma.vmem_to_hbm [thread:$0]  %s606, 64, %s608, %s572
        $region72: #{tpu_custom_call.1} parent=43 // pred_fallthru
          _
        // Predicated region
        $region73: #{tpu_custom_call.1} parent=43 // pred_check
          %p611 = pneg %p252
        $region74: #{tpu_custom_call.1} parent=43 // pred_check_branch
          %613 = sbr.rel (%p611) target = $region76
        $region75: #{tpu_custom_call.1} parent=43 // pred_region
          %615 = vsyncadd %s577, 0
          %s616 = sadd.s32 %s36, %s35
          %s617 = smul.addr %s616, 4
          %s618 = scalar_lea.hbm %s8, %s617
          %s620 = sshll.u32 %s580, 4
          %s621 = int_to_ptr.vmem [resolvable:$true] %s620
          %s622 = sshll.u32 %s618, 4
          %s623 = int_to_ptr.hbm [resolvable:$true] %s622
          %625 = dma.vmem_to_hbm [thread:$0]  %s621, 64, %s623, %s577
        $region76: #{tpu_custom_call.1} parent=43 // pred_fallthru
          _
      $region44: #{tpu_custom_call.1} parent=5 // pred_fallthru
        _
      %p626 = scmp.le.s32.totalorder 2, %s26
      // Predicated region
      $region77: #{tpu_custom_call.1} parent=5 // pred_check
        %p627 = pneg %p626
      $region78: #{tpu_custom_call.1} parent=5 // pred_check_branch
        %629 = sbr.rel (%p627) target = $region80
      $region79: #{tpu_custom_call.1} parent=5 // pred_region
        %s630 = ssub.s32 %s26, 2
        // Predicated region
        $region81: #{tpu_custom_call.1} parent=79 // pred_check
          %p631 = pneg %p202
        $region82: #{tpu_custom_call.1} parent=79 // pred_check_branch
          %633 = sbr.rel (%p631) target = $region84
        $region83: #{tpu_custom_call.1} parent=79 // pred_region
          %s634 = sand.u32 %s187, 1
          %s635 = scalar_lea.sflag [#allocation4], %s634
          %s636 = sand.u32 %s187, 1
          %s637 = smul.addr %s636, 4
          %s638 = scalar_lea.vmem [#allocation11], %s637
          %640 = dma.done %s635, 64
        $region84: #{tpu_custom_call.1} parent=79 // pred_fallthru
          _
        // Predicated region
        $region85: #{tpu_custom_call.1} parent=79 // pred_check
          %p641 = pneg %p230
        $region86: #{tpu_custom_call.1} parent=79 // pred_check_branch
          %643 = sbr.rel (%p641) target = $region88
        $region87: #{tpu_custom_call.1} parent=79 // pred_region
          %s644 = sand.u32 %s32, 1
          %s645 = scalar_lea.sflag [#allocation13], %s644
          %s646 = sand.u32 %s215, 1
          %s647 = smul.addr %s646, 4
          %s648 = scalar_lea.vmem [#allocation12], %s647
          %650 = dma.done %s645, 64
        $region88: #{tpu_custom_call.1} parent=79 // pred_fallthru
          _
        // Predicated region
        $region89: #{tpu_custom_call.1} parent=79 // pred_check
          %p651 = pneg %p258
        $region90: #{tpu_custom_call.1} parent=79 // pred_check_branch
          %653 = sbr.rel (%p651) target = $region92
        $region91: #{tpu_custom_call.1} parent=79 // pred_region
          %s654 = sand.u32 %s32, 1
          %s655 = scalar_lea.sflag [#allocation13], %s654
          %s656 = sand.u32 %s243, 1
          %s657 = smul.addr %s656, 4
          %s658 = scalar_lea.vmem [#allocation14], %s657
          %660 = dma.done %s655, 64
        $region92: #{tpu_custom_call.1} parent=79 // pred_fallthru
          _
      $region80: #{tpu_custom_call.1} parent=5 // pred_fallthru
        _
    $region6: #{tpu_custom_call.1} parent=1 // loop_footer
      %s30 = sadd.s32 1, %s26
    $region7: #{tpu_custom_call.1} parent=1 // loop_footer_branch
      %25 = sbr.rel target = $region3
    $region8: #{tpu_custom_call.1} parent=1 // loop_exit
      _
    %661 = vsyncpa [#allocation3], 1
    %s662 = scalar_lea.sflag [#allocation3], 1
    %663 = vsyncpa %s662, 1
    %664 = vsyncpa [#allocation6], 1
    %665 = vsyncpa [#allocation9], 1
    %666 = vsyncpa [#allocation4], 1
    %s667 = scalar_lea.sflag [#allocation4], 1
    %668 = vsyncpa %s667, 1
    %669 = vsyncpa [#allocation13], 1
    %s670 = scalar_lea.sflag [#allocation13], 1
    %671 = vsyncpa %s670, 1

</llo_original>
